<compile_context>
chip_gen: v6e
topology: v6e:2x2x1
jax: 0.10.0
libtpu: 0.0.40
codegen_flags: <defaults>
</compile_context>

<pallas_src>
import functools

import jax
import jax.numpy as jnp
from jax import lax
from jax.experimental import pallas as pl
from jax.experimental.pallas import tpu as pltpu


_LANE_COLS = 512          # retile width: lane-dense (multiple of 128)
_SPLIT_BYTES = 1 << 20    # inputs larger than this get >= 2 grid programs (v7x megacore)


def _envelope_kernel(x_ref, o_ref, *, r_max, p):
    """Elementwise DimeNet envelope on one (block_rows, cols) tile (VPU only)."""
    x = x_ref[...].astype(jnp.float32)
    u = x * (1.0 / r_max)
    # Integer power via repeated VPU multiplies — never exp/log on the single
    # EUP slot.  Note: integer_pow is finite for negative bases whereas the
    # reference's u ** float(p) would be NaN; distances are non-negative so
    # this difference never materializes.
    u_p = lax.integer_pow(u, p)

    a = (p + 1.0) * (p + 2.0) / 2.0
    b = p * (p + 2.0)
    c = p * (p + 1.0) / 2.0
    # 1 - a*u^p + b*u^(p+1) - c*u^(p+2)  ==  1 - u^p * (a - u*(b - c*u))
    smooth = 1.0 - u_p * (a - u * (b - c * u))
    # smooth_coef[x >= r_max] = 0.0  (scalar in the where -> no extra vreg)
    smooth = jnp.where(x >= r_max, 0.0, smooth)
    o_ref[...] = smooth.astype(o_ref.dtype)


def envelope(x, r_max, p, *, block_rows=None,
             target_tile_bytes=2 * 1024 * 1024, retile_cols=_LANE_COLS):
    """Pallas implementation of Envelope.forward for any-shaped float input."""
    r_max = float(r_max)
    p = int(p)

    orig_shape = x.shape
    n = int(x.size)
    if n == 0:
        return x

    # ---- Canonicalize: flatten -> pad -> lane-dense (rows, C) retile. ----
    C = int(retile_cols)
    assert C % 128 == 0
    flat = x.reshape(-1)
    pad = (-n) % C
    if pad:
        flat = jnp.pad(flat, (0, pad))        # envelope(0)=1, finite; sliced off below
    rows = (n + pad) // C
    x2 = flat.reshape(rows, C)

    itemsize = jnp.dtype(x.dtype).itemsize
    if block_rows is None:
        # Size the tile from the actual I/O itemsize (bf16 -> 2x rows per tile).
        bytes_per_row = C * itemsize
        fit_rows = max(8, (target_tile_bytes // bytes_per_row) // 8 * 8)
        block_rows = min(rows, fit_rows)
        # Force >= 2 grid programs for non-tiny inputs so both v7x TensorCores
        # share the HBM traffic of this memory-bound kernel.
        if rows * C * itemsize > _SPLIT_BYTES and block_rows >= rows:
            block_rows = max(8, ((pl.cdiv(rows, 2) + 7) // 8) * 8)
        if block_rows >= rows:
            block_rows = rows                       # single full-extent block (tiny input)
        else:
            block_rows = max(8, (block_rows // 8) * 8)   # (8,128) tiling rule
    block_rows = int(block_rows)

    grid = (pl.cdiv(rows, block_rows),)
    kernel = functools.partial(_envelope_kernel, r_max=r_max, p=p)

    out2 = pl.pallas_call(
        kernel,
        out_shape=jax.ShapeDtypeStruct((rows, C), x.dtype),
        grid=grid,
        in_specs=[pl.BlockSpec((block_rows, C), lambda i: (i, 0))],
        out_specs=pl.BlockSpec((block_rows, C), lambda i: (i, 0)),
        compiler_params=pltpu.CompilerParams(
            dimension_semantics=("parallel",)),
    )(x2)

    out = out2.reshape(-1)
    if pad:
        out = out[:n]
    return out.reshape(orig_shape)


def envelope_ref(x, r_max, p):
    """Pure-JAX reference matching the PyTorch forward."""
    p = float(p)
    u = x / r_max
    smooth = (1.0
              - (p + 1.0) * (p + 2.0) / 2.0 * u ** p
              + p * (p + 2.0) * u ** (p + 1.0)
              - p * (p + 1.0) / 2.0 * u ** (p + 2.0))
    return jnp.where(x >= r_max, 0.0, smooth)


if __name__ == "__main__":
    # Module hyperparameters (from __init__): r_max, p
    r_max = 5.0
    p = 6

    key = jax.random.PRNGKey(0)
    k1, k2, k3 = jax.random.split(key, 3)

    # Case 1: small 2-D batch of distances; some entries exceed the cutoff.
    x1 = jax.random.uniform(k1, (32, 256), dtype=jnp.float32,
                            minval=0.0, maxval=1.5 * r_max)
    out1 = jax.block_until_ready(envelope(x1, r_max, p))
    ref1 = envelope_ref(x1, r_max, p)
    assert out1.shape == x1.shape and out1.dtype == x1.dtype
    assert jnp.allclose(out1, ref1, atol=1e-5, rtol=1e-5), "mismatch (case 1)"

    # Case 2: 1-D edge-distance vector with an awkward length (exercises the
    # flatten + pad + retile path).
    x2 = jax.random.uniform(k2, (1000,), dtype=jnp.float32,
                            minval=0.0, maxval=1.5 * r_max)
    out2 = jax.block_until_ready(envelope(x2, r_max, p))
    ref2 = envelope_ref(x2, r_max, p)
    assert out2.shape == x2.shape and out2.dtype == x2.dtype
    assert jnp.allclose(out2, ref2, atol=1e-5, rtol=1e-5), "mismatch (case 2)"

    # Case 3: 3-D input, explicit small block_rows -> multi-block grid with a
    # ragged (masked) last block.
    x3 = jax.random.uniform(k3, (7, 30, 50), dtype=jnp.float32,
                            minval=0.0, maxval=1.5 * r_max)
    out3 = jax.block_until_ready(envelope(x3, r_max, p, block_rows=8))
    ref3 = envelope_ref(x3, r_max, p)
    assert out3.shape == x3.shape and out3.dtype == x3.dtype
    assert jnp.allclose(out3, ref3, atol=1e-5, rtol=1e-5), "mismatch (case 3)"

    print("KERNEL_OK")
</pallas_src>

<mosaic_0001>
module attributes {stable_mosaic.version = 11 : i64} {
  func.func @_envelope_kernel(%arg0: i32, %arg1: memref<16x512xf32, #tpu.memory_space<vmem>>, %arg2: memref<16x512xf32, #tpu.memory_space<vmem>>) attributes {dimension_semantics = [#tpu.dimension_semantics<parallel>], iteration_bounds = array<i64: 1>, scalar_prefetch = 0 : i64, scratch_operands = 0 : i64, tpu.core_type = #tpu.core_type<tc>, window_params = [{transform_indices = @transform_0, window_bounds = array<i64: 16, 512>}, {transform_indices = @transform_1, window_bounds = array<i64: 16, 512>}]} {
    %c0 = arith.constant 0 : index
    %c0_0 = arith.constant 0 : index
    %0 = vector.load %arg1[%c0, %c0_0] : memref<16x512xf32, #tpu.memory_space<vmem>>, vector<16x512xf32>
    %cst = arith.constant 2.000000e-01 : f32
    %1 = vector.broadcast %cst : f32 to vector<16x512xf32>
    %2 = arith.mulf %0, %1 : vector<16x512xf32>
    %3 = arith.mulf %2, %2 : vector<16x512xf32>
    %4 = arith.mulf %3, %3 : vector<16x512xf32>
    %5 = arith.mulf %3, %4 : vector<16x512xf32>
    %cst_1 = arith.constant 2.100000e+01 : f32
    %6 = vector.broadcast %cst_1 : f32 to vector<16x512xf32>
    %7 = arith.mulf %6, %2 : vector<16x512xf32>
    %cst_2 = arith.constant 4.800000e+01 : f32
    %8 = vector.broadcast %cst_2 : f32 to vector<16x512xf32>
    %9 = arith.subf %8, %7 : vector<16x512xf32>
    %10 = arith.mulf %2, %9 : vector<16x512xf32>
    %cst_3 = arith.constant 2.800000e+01 : f32
    %11 = vector.broadcast %cst_3 : f32 to vector<16x512xf32>
    %12 = arith.subf %11, %10 : vector<16x512xf32>
    %13 = arith.mulf %5, %12 : vector<16x512xf32>
    %cst_4 = arith.constant 1.000000e+00 : f32
    %14 = vector.broadcast %cst_4 : f32 to vector<16x512xf32>
    %15 = arith.subf %14, %13 : vector<16x512xf32>
    %cst_5 = arith.constant 5.000000e+00 : f32
    %16 = vector.broadcast %cst_5 : f32 to vector<16x512xf32>
    %17 = arith.cmpf oge, %0, %16 : vector<16x512xf32>
    %cst_6 = arith.constant 0.000000e+00 : f32
    %18 = vector.broadcast %cst_6 : f32 to vector<16x512xf32>
    %19 = arith.select %17, %18, %15 : vector<16x512xi1>, vector<16x512xf32>
    %c0_7 = arith.constant 0 : index
    %c0_8 = arith.constant 0 : index
    %20 = vector.load %arg2[%c0_7, %c0_8] : memref<16x512xf32, #tpu.memory_space<vmem>>, vector<16x512xf32>
    tpu.vector_store %arg2[%c0_7, %c0_8], %19 {strides = array<i32>} : memref<16x512xf32, #tpu.memory_space<vmem>>, vector<16x512xf32>,
    return
  }
  func.func @transform_0(%arg0: i32) -> (i32, i32) {
    %c0_i32 = arith.constant 0 : i32
    %c0_i32_0 = arith.constant 0 : i32
    return %arg0, %c0_i32 : i32, i32
  }
  func.func @transform_1(%arg0: i32) -> (i32, i32) {
    %c0_i32 = arith.constant 0 : i32
    %c0_i32_0 = arith.constant 0 : i32
    return %arg0, %c0_i32 : i32, i32
  }
}

</mosaic_0001>

<llo_original>
// kernel: tpu_custom_call.1
$region0: #{tpu_custom_call.1}
  #allocation0 [shape = 'u32[]', space=smem, size = 0x4, offset = 0x4, fixed_abs, tag = 'smem constant byte address 0x4 - core index']
  #allocation1 [shape = 'u32[144,128]{1,0:T(1,128)}', space=vmem, size = 0x12000, scoped, tag = 'internal scratch']
  %s0 = inlined_call_operand.hbm [shape: f32[16,512], index: 0, kind: input, shape index: {}]
  %s1 = inlined_call_operand.hbm [shape: f32[16,512], index: 1, kind: output, shape index: {}]
  %s2 = sld [smem:[#allocation0]]
  $region18: #{tpu_custom_call.1} parent=0
    _
  %s4 = ssub.s32 1, %s2
  %s5 = scalar_select 0, %s4, %s2
  $region1: #{tpu_custom_call.1} parent=0
    #allocation2 [shape = 'u8[32768]{0}', space=vmem, size = 0x8000, scoped, tag = 'input window, operand 0, single buffered']
    #allocation3 [shape = 's32[1]{0}', space=sflag, size = 0x4, scoped, tag = 'scoped memory for tpu_custom_call.1']
    #allocation4 [shape = 's32[1]{0}', space=sflag, size = 0x4, scoped, tag = 'scoped memory for tpu_custom_call.1']
    #allocation5 [shape = 'u8[32768]{0}', space=vmem, size = 0x8000, scoped, tag = 'output window, operand 0, single buffered']
    %6 = vsyncpa [#allocation3], 0
    %7 = vsyncpa [#allocation4], 0
    // Predicated region
    $region2: #{tpu_custom_call.1} parent=1 // pred_check
      _
    $region3: #{tpu_custom_call.1} parent=1 // pred_check_branch
      %9 = sbr.rel (0) target = $region5
    $region4: #{tpu_custom_call.1} parent=1 // pred_region
      %s11 = ssub.s32 1024, 1024
      %12 = vsyncadd [#allocation3], %s11
      %s13 = sshll.u32 [#allocation2], 4
      %s14 = int_to_ptr.vmem [resolvable:$true] %s13
      %19 = dma.hbm_to_vmem [thread:$0]  %s0, 1024, %s14, [#allocation3], 512, 512, 32
    $region5: #{tpu_custom_call.1} parent=1 // pred_fallthru
      _
    // Predicated region
    $region6: #{tpu_custom_call.1} parent=1 // pred_check
      _
    $region7: #{tpu_custom_call.1} parent=1 // pred_check_branch
      %21 = sbr.rel (0) target = $region9
    $region8: #{tpu_custom_call.1} parent=1 // pred_region
      %22 = dma.done [#allocation3], 1024
    $region9: #{tpu_custom_call.1} parent=1 // pred_fallthru
      _
    %v23 = vld [vmem:[#allocation2] sm:$0xff]
    %v24 = vld [vmem:[#allocation2 + $0x8] sm:$0xff]
    %v25 = vld [vmem:[#allocation2 + $0x10] sm:$0xff]
    %v26 = vld [vmem:[#allocation2 + $0x18] sm:$0xff]
    %v27 = vld [vmem:[#allocation2 + $0x20] sm:$0xff]
    %v28 = vld [vmem:[#allocation2 + $0x28] sm:$0xff]
    %v29 = vld [vmem:[#allocation2 + $0x30] sm:$0xff]
    %v30 = vld [vmem:[#allocation2 + $0x38] sm:$0xff]
    %v31 = vmul.f32 %v23, 0.2
    %v32 = vmul.f32 %v24, 0.2
    %v33 = vmul.f32 %v25, 0.2
    %v34 = vmul.f32 %v26, 0.2
    %v35 = vmul.f32 %v27, 0.2
    %v36 = vmul.f32 %v28, 0.2
    %v37 = vmul.f32 %v29, 0.2
    %v38 = vmul.f32 %v30, 0.2
    %v39 = vmul.f32 %v31, %v31
    %v40 = vmul.f32 %v32, %v32
    %v41 = vmul.f32 %v33, %v33
    %v42 = vmul.f32 %v34, %v34
    %v43 = vmul.f32 %v35, %v35
    %v44 = vmul.f32 %v36, %v36
    %v45 = vmul.f32 %v37, %v37
    %v46 = vmul.f32 %v38, %v38
    %v47 = vmul.f32 %v39, %v39
    %v48 = vmul.f32 %v40, %v40
    %v49 = vmul.f32 %v41, %v41
    %v50 = vmul.f32 %v42, %v42
    %v51 = vmul.f32 %v43, %v43
    %v52 = vmul.f32 %v44, %v44
    %v53 = vmul.f32 %v45, %v45
    %v54 = vmul.f32 %v46, %v46
    %v55 = vmul.f32 %v39, %v47
    %v56 = vmul.f32 %v40, %v48
    %v57 = vmul.f32 %v41, %v49
    %v58 = vmul.f32 %v42, %v50
    %v59 = vmul.f32 %v43, %v51
    %v60 = vmul.f32 %v44, %v52
    %v61 = vmul.f32 %v45, %v53
    %v62 = vmul.f32 %v46, %v54
    %v63 = vmul.f32 %v31, 21.0
    %v64 = vmul.f32 %v32, 21.0
    %v65 = vmul.f32 %v33, 21.0
    %v66 = vmul.f32 %v34, 21.0
    %v67 = vmul.f32 %v35, 21.0
    %v68 = vmul.f32 %v36, 21.0
    %v69 = vmul.f32 %v37, 21.0
    %v70 = vmul.f32 %v38, 21.0
    %v71 = vsub.f32 48.0, %v63
    %v72 = vsub.f32 48.0, %v64
    %v73 = vsub.f32 48.0, %v65
    %v74 = vsub.f32 48.0, %v66
    %v75 = vsub.f32 48.0, %v67
    %v76 = vsub.f32 48.0, %v68
    %v77 = vsub.f32 48.0, %v69
    %v78 = vsub.f32 48.0, %v70
    %v79 = vmul.f32 %v31, %v71
    %v80 = vmul.f32 %v32, %v72
    %v81 = vmul.f32 %v33, %v73
    %v82 = vmul.f32 %v34, %v74
    %v83 = vmul.f32 %v35, %v75
    %v84 = vmul.f32 %v36, %v76
    %v85 = vmul.f32 %v37, %v77
    %v86 = vmul.f32 %v38, %v78
    %v87 = vsub.f32 28.0, %v79
    %v88 = vsub.f32 28.0, %v80
    %v89 = vsub.f32 28.0, %v81
    %v90 = vsub.f32 28.0, %v82
    %v91 = vsub.f32 28.0, %v83
    %v92 = vsub.f32 28.0, %v84
    %v93 = vsub.f32 28.0, %v85
    %v94 = vsub.f32 28.0, %v86
    %v95 = vmul.f32 %v55, %v87
    %v96 = vmul.f32 %v56, %v88
    %v97 = vmul.f32 %v57, %v89
    %v98 = vmul.f32 %v58, %v90
    %v99 = vmul.f32 %v59, %v91
    %v100 = vmul.f32 %v60, %v92
    %v101 = vmul.f32 %v61, %v93
    %v102 = vmul.f32 %v62, %v94
    %v103 = vsub.f32 1.0, %v95
    %v104 = vsub.f32 1.0, %v96
    %v105 = vsub.f32 1.0, %v97
    %v106 = vsub.f32 1.0, %v98
    %v107 = vsub.f32 1.0, %v99
    %v108 = vsub.f32 1.0, %v100
    %v109 = vsub.f32 1.0, %v101
    %v110 = vsub.f32 1.0, %v102
    %vm111 = vcmp.ge.f32.partialorder %v23, 5.0
    %vm112 = vcmp.ge.f32.partialorder %v24, 5.0
    %vm113 = vcmp.ge.f32.partialorder %v25, 5.0
    %vm114 = vcmp.ge.f32.partialorder %v26, 5.0
    %vm115 = vcmp.ge.f32.partialorder %v27, 5.0
    %vm116 = vcmp.ge.f32.partialorder %v28, 5.0
    %vm117 = vcmp.ge.f32.partialorder %v29, 5.0
    %vm118 = vcmp.ge.f32.partialorder %v30, 5.0
    %v119 = vsel %vm111, 0.0, %v103
    %v120 = vsel %vm112, 0.0, %v104
    %v121 = vsel %vm113, 0.0, %v105
    %v122 = vsel %vm114, 0.0, %v106
    %v123 = vsel %vm115, 0.0, %v107
    %v124 = vsel %vm116, 0.0, %v108
    %v125 = vsel %vm117, 0.0, %v109
    %v126 = vsel %vm118, 0.0, %v110
    %127 = vst [vmem:[#allocation5] sm:$0xff] %v119
    %128 = vst [vmem:[#allocation5 + $0x8] sm:$0xff] %v120
    %129 = vst [vmem:[#allocation5 + $0x10] sm:$0xff] %v121
    %130 = vst [vmem:[#allocation5 + $0x18] sm:$0xff] %v122
    %131 = vst [vmem:[#allocation5 + $0x20] sm:$0xff] %v123
    %132 = vst [vmem:[#allocation5 + $0x28] sm:$0xff] %v124
    %133 = vst [vmem:[#allocation5 + $0x30] sm:$0xff] %v125
    %134 = vst [vmem:[#allocation5 + $0x38] sm:$0xff] %v126
    // Predicated region
    $region10: #{tpu_custom_call.1} parent=1 // pred_check
      _
    $region11: #{tpu_custom_call.1} parent=1 // pred_check_branch
      %136 = sbr.rel (0) target = $region13
    $region12: #{tpu_custom_call.1} parent=1 // pred_region
      %s138 = ssub.s32 1024, 1024
      %139 = vsyncadd [#allocation4], %s138
      %s140 = sshll.u32 [#allocation5], 4
      %s141 = int_to_ptr.vmem [resolvable:$true] %s140
      %146 = dma.vmem_to_hbm [thread:$0]  %s141, 1024, %s1, [#allocation4], 512, 512, 32
    $region13: #{tpu_custom_call.1} parent=1 // pred_fallthru
      _
    // Predicated region
    $region14: #{tpu_custom_call.1} parent=1 // pred_check
      _
    $region15: #{tpu_custom_call.1} parent=1 // pred_check_branch
      %148 = sbr.rel (0) target = $region17
    $region16: #{tpu_custom_call.1} parent=1 // pred_region
      %149 = dma.done [#allocation4], 1024
    $region17: #{tpu_custom_call.1} parent=1 // pred_fallthru
      _
    %150 = vsyncpa [#allocation3], 1
    %151 = vsyncpa [#allocation4], 1

</llo_original>
